<compile_context>
chip_gen: v7x
topology: tpu7x:2x2x1
jax: 0.10.0
libtpu: 0.0.40
codegen_flags: <defaults>
</compile_context>

<pallas_src>
import math

import jax
import jax.numpy as jnp
from jax.experimental import pallas as pl
from jax.experimental.pallas import tpu as pltpu

_GELU_C = math.sqrt(2.0 / math.pi)
_ALIGN = 256                    # feature-dim alignment (v6e/v7x MXU is 2x256x256)
_VMEM_BUDGET = 44 * 2**20       # tile-plan budget: headroom under v7x's 64 MiB
_VMEM_LIMIT_CAP = 48 * 2**20    # never ask the compiler for more than this


def _gelu_new(x):
    # gelu_new: 0.5 * x * (1 + tanh(sqrt(2/pi) * (x + 0.044715 * x^3)))
    # factored as x * (1 + 0.044715*x*x) to drop one VPU multiply.
    return 0.5 * x * (1.0 + jnp.tanh(_GELU_C * x * (1.0 + 0.044715 * x * x)))


def _round_up(v, m):
    return (v + m - 1) // m * m


def _pick_tk(ns_p, target):
    """Largest multiple of 256 <= target that divides ns_p (ns_p % 256 == 0)."""
    target = max(256, min(target, ns_p))
    for tk in range(target - target % 256, 255, -256):
        if ns_p % tk == 0:
            return tk
    return 256


# -----------------------------------------------------------------------------
# Kernels
# -----------------------------------------------------------------------------
def _mlp_resident_kernel(x_ref, wfc_ref, bfc_ref, wproj_ref, bproj_ref, o_ref):
    """Weight-resident path: full c_fc -> gelu_new -> c_proj for one M tile."""
    h = jnp.dot(x_ref[...], wfc_ref[...], preferred_element_type=jnp.float32)
    h = _gelu_new(h + bfc_ref[...])
    out = jnp.dot(h.astype(wproj_ref.dtype), wproj_ref[...],
                  preferred_element_type=jnp.float32)
    # TODO(synk): dropout(resid_pdrop) is identity in eval mode; training mode
    # would mask here with pltpu.prng_seed / pltpu.prng_random_bits.
    o_ref[...] = (out + bproj_ref[...]).astype(o_ref.dtype)


def _mlp_ktiled_kernel(x_ref, wfc_ref, bfc_ref, wproj_ref, bproj_ref, o_ref,
                       acc_ref):
    """Streaming fallback: hidden (4*nx) dim K-tiled, f32 accumulator in VMEM."""
    k = pl.program_id(1)

    @pl.when(k == 0)
    def _init():
        acc_ref[...] = jnp.zeros_like(acc_ref)

    h = jnp.dot(x_ref[...], wfc_ref[...], preferred_element_type=jnp.float32)
    h = _gelu_new(h + bfc_ref[...])
    acc_ref[...] += jnp.dot(h.astype(wproj_ref.dtype), wproj_ref[...],
                            preferred_element_type=jnp.float32)

    @pl.when(k == pl.num_programs(1) - 1)
    def _finalize():
        o_ref[...] = (acc_ref[...] + bproj_ref[...]).astype(o_ref.dtype)


# -----------------------------------------------------------------------------
# Host-side wrappers
# -----------------------------------------------------------------------------
def prepare_mlp_params(w_fc, b_fc, w_proj, b_proj, align=_ALIGN):
    """One-time pad + f32->bf16 cast of the MLP weights (hoisted off hot path)."""
    nx, n_state = w_fc.shape
    nx_p = _round_up(nx, align)
    ns_p = _round_up(n_state, align)
    wfc = jnp.zeros((nx_p, ns_p), jnp.bfloat16).at[:nx, :n_state].set(
        w_fc.astype(jnp.bfloat16))
    wpj = jnp.zeros((ns_p, nx_p), jnp.bfloat16).at[:n_state, :nx].set(
        w_proj.astype(jnp.bfloat16))
    bfc = jnp.zeros((1, ns_p), jnp.float32).at[:, :n_state].set(
        b_fc.reshape(1, n_state).astype(jnp.float32))
    bpj = jnp.zeros((1, nx_p), jnp.float32).at[:, :nx].set(
        b_proj.reshape(1, nx).astype(jnp.float32))
    return dict(w_fc=wfc, b_fc=bfc, w_proj=wpj, b_proj=bpj,
                nx=nx, n_state=n_state)


def mlp_forward(x, params, *, tm_max=256, tm_stream=512, tk_target=1024):
    """GPT MLP forward (eval): c_proj(gelu_new(c_fc(x))); dropout is identity."""
    wfc, bfc = params["w_fc"], params["b_fc"]
    wpj, bpj = params["w_proj"], params["b_proj"]
    nx, n_state = params["nx"], params["n_state"]
    nx_p, ns_p = wfc.shape

    B, S, _ = x.shape
    M = B * S
    out_dtype = x.dtype
    out_bytes = jnp.dtype(out_dtype).itemsize
    w_bytes = (wfc.size + wpj.size) * 2      # both weight matrices, bf16

    # Adaptive M tile: don't pad a small decode batch up to a 256-row tile.
    tm = min(tm_max, _round_up(M, 8))

    def resident_vmem(tm_):
        return (2 * w_bytes                        # weight slabs (double-buffered)
                + 2 * tm_ * nx_p * 2               # x tile (bf16)
                + 2 * tm_ * nx_p * out_bytes       # output tile
                + 2 * (ns_p + nx_p) * 4            # biases (f32)
                + tm_ * ns_p * (4 + 2))            # gelu intermediate f32 + bf16

    use_resident = resident_vmem(tm) <= _VMEM_BUDGET

    if use_resident:
        est = resident_vmem(tm)
        tk = ns_p
    else:
        # Streaming: larger M tile so arithmetic intensity (~tm/2 flop per byte
        # of weight traffic) clears the HBM ridge; tk always divides ns_p.
        tm = min(tm_stream, _round_up(M, 8))
        tk = _pick_tk(ns_p, tk_target)

        def stream_vmem(tm_, tk_):
            return (2 * tm_ * nx_p * 2             # x tile (bf16)
                    + 2 * nx_p * tk_ * 2           # W_fc k-slice
                    + 2 * tk_ * nx_p * 2           # W_proj k-slice
                    + 2 * (tk_ + nx_p) * 4         # bias slices
                    + 2 * tm_ * nx_p * out_bytes   # output tile
                    + tm_ * nx_p * 4               # f32 accumulator
                    + tm_ * tk_ * (4 + 2))         # gelu intermediate

        while stream_vmem(tm, tk) > _VMEM_BUDGET and tk > 256:
            tk = _pick_tk(ns_p, tk - 256)
        while stream_vmem(tm, tk) > _VMEM_BUDGET and tm > 64:
            tm = max(64, _round_up(tm // 2, 8))
        est = stream_vmem(tm, tk)

    M_p = _round_up(M, tm)
    m_tiles = M_p // tm
    k_tiles = ns_p // tk

    # Only pad/copy x when misaligned (weights were padded/cast once above).
    x2d = x.reshape(M, nx)
    if M_p == M and nx_p == nx:
        x2d = x2d.astype(jnp.bfloat16)
    else:
        x2d = jnp.zeros((M_p, nx_p), jnp.bfloat16).at[:M, :nx].set(
            x2d.astype(jnp.bfloat16))

    vmem_limit = int(min(_VMEM_LIMIT_CAP, max(int(1.25 * est), 32 * 2**20)))
    weight_fetches = 1 if use_resident else m_tiles
    cost = pl.CostEstimate(
        flops=4 * M_p * nx_p * ns_p,               # two matmuls
        transcendentals=M_p * ns_p,                # tanh in gelu_new
        bytes_accessed=int(x2d.size * 2 + weight_fetches * w_bytes
                           + (bfc.size + bpj.size) * 4
                           + M_p * nx_p * out_bytes),
    )

    if use_resident:
        kernel = _mlp_resident_kernel
        semantics = ("parallel",)
        grid_spec = pltpu.PrefetchScalarGridSpec(
            num_scalar_prefetch=0,
            grid=(m_tiles,),
            in_specs=[
                pl.BlockSpec((tm, nx_p), lambda i: (i, 0)),     # x tile
                pl.BlockSpec((nx_p, ns_p), lambda i: (0, 0)),   # W_fc (resident)
                pl.BlockSpec((1, ns_p), lambda i: (0, 0)),      # b_fc
                pl.BlockSpec((ns_p, nx_p), lambda i: (0, 0)),   # W_proj (resident)
                pl.BlockSpec((1, nx_p), lambda i: (0, 0)),      # b_proj
            ],
            out_specs=pl.BlockSpec((tm, nx_p), lambda i: (i, 0)),
        )
    else:
        kernel = _mlp_ktiled_kernel
        semantics = ("parallel", "arbitrary")
        grid_spec = pltpu.PrefetchScalarGridSpec(
            num_scalar_prefetch=0,
            grid=(m_tiles, k_tiles),               # reduction (k) axis last
            in_specs=[
                pl.BlockSpec((tm, nx_p), lambda i, k: (i, 0)),  # x tile
                pl.BlockSpec((nx_p, tk), lambda i, k: (0, k)),  # W_fc k-slice
                pl.BlockSpec((1, tk), lambda i, k: (0, k)),     # b_fc k-slice
                pl.BlockSpec((tk, nx_p), lambda i, k: (k, 0)),  # W_proj k-slice
                pl.BlockSpec((1, nx_p), lambda i, k: (0, 0)),   # b_proj
            ],
            out_specs=pl.BlockSpec((tm, nx_p), lambda i, k: (i, 0)),
            scratch_shapes=[pltpu.VMEM((tm, nx_p), jnp.float32)],
        )

    out = pl.pallas_call(
        kernel,
        out_shape=jax.ShapeDtypeStruct((M_p, nx_p), out_dtype),
        grid_spec=grid_spec,
        compiler_params=pltpu.CompilerParams(
            dimension_semantics=semantics,
            vmem_limit_bytes=vmem_limit),
        cost_estimate=cost,
    )(x2d, wfc, bfc, wpj, bpj)

    if M_p == M and nx_p == nx:
        return out.reshape(B, S, nx)
    return out[:M, :nx].reshape(B, S, nx)


def _reference(x, w_fc, b_fc, w_proj, b_proj):
    h = _gelu_new(jnp.einsum("bsd,df->bsf", x, w_fc) + b_fc)
    return jnp.einsum("bsf,fd->bsd", h, w_proj) + b_proj


if __name__ == "__main__":
    # Small shapes consistent with the module: nx = n_embd, n_state = 4 * n_embd
    B, S, nx = 2, 8, 32
    n_state = 4 * nx  # 128

    key = jax.random.PRNGKey(0)
    kx, kwf, kbf, kwp, kbp = jax.random.split(key, 5)

    x = jax.random.normal(kx, (B, S, nx), dtype=jnp.float32)
    # Conv1D init: weight ~ N(0, 0.02); small random bias to exercise bias path.
    w_fc = 0.02 * jax.random.normal(kwf, (nx, n_state), dtype=jnp.float32)
    b_fc = 0.01 * jax.random.normal(kbf, (n_state,), dtype=jnp.float32)
    w_proj = 0.02 * jax.random.normal(kwp, (n_state, nx), dtype=jnp.float32)
    b_proj = 0.01 * jax.random.normal(kbp, (nx,), dtype=jnp.float32)

    # One-time weight prep (pad + bf16 cast), hoisted out of the hot path.
    params = prepare_mlp_params(w_fc, b_fc, w_proj, b_proj)

    out = mlp_forward(x, params)
    out = jax.block_until_ready(out)

    ref = _reference(x, w_fc, b_fc, w_proj, b_proj)
    assert out.shape == (B, S, nx)
    # bf16 MXU inputs with f32 accumulation -> looser tolerance than pure f32.
    max_err = float(jnp.max(jnp.abs(out - ref)))
    assert max_err < 5e-3, f"mismatch vs reference (max abs err {max_err})"

    print("KERNEL_OK")
</pallas_src>

<mosaic_0001>
module attributes {stable_mosaic.version = 11 : i64} {
  func.func @_mlp_resident_kernel(%arg0: i32, %arg1: memref<16x256xbf16, #tpu.memory_space<vmem>>, %arg2: memref<256x256xbf16, #tpu.memory_space<vmem>>, %arg3: memref<1x256xf32, #tpu.memory_space<vmem>>, %arg4: memref<256x256xbf16, #tpu.memory_space<vmem>>, %arg5: memref<1x256xf32, #tpu.memory_space<vmem>>, %arg6: memref<16x256xf32, #tpu.memory_space<vmem>>) attributes {dimension_semantics = [#tpu.dimension_semantics<parallel>], iteration_bounds = array<i64: 1>, scalar_prefetch = 0 : i64, scratch_operands = 0 : i64, tpu.core_type = #tpu.core_type<tc>, window_params = [{transform_indices = @transform_0, window_bounds = array<i64: 16, 256>}, {pipeline_mode = #tpu.pipeline_mode<synchronous>, transform_indices = @transform_1, window_bounds = array<i64: 256, 256>}, {pipeline_mode = #tpu.pipeline_mode<synchronous>, transform_indices = @transform_2, window_bounds = array<i64: 1, 256>}, {pipeline_mode = #tpu.pipeline_mode<synchronous>, transform_indices = @transform_3, window_bounds = array<i64: 256, 256>}, {pipeline_mode = #tpu.pipeline_mode<synchronous>, transform_indices = @transform_4, window_bounds = array<i64: 1, 256>}, {transform_indices = @transform_5, window_bounds = array<i64: 16, 256>}]} {
    %c0 = arith.constant 0 : index
    %c0_0 = arith.constant 0 : index
    %0 = vector.load %arg1[%c0, %c0_0] : memref<16x256xbf16, #tpu.memory_space<vmem>>, vector<16x256xbf16>
    %c0_1 = arith.constant 0 : index
    %c0_2 = arith.constant 0 : index
    %1 = vector.load %arg2[%c0_1, %c0_2] : memref<256x256xbf16, #tpu.memory_space<vmem>>, vector<256x256xbf16>
    %cst = arith.constant dense<0.000000e+00> : vector<16x256xf32>
    %2 = tpu.matmul %0, %1, %cst {dimension_numbers = #tpu.dot_dimension_numbers<[1], [0], [0], [1], [0, 0, 1, 1], [], []>} : vector<16x256xbf16>, vector<256x256xbf16>, vector<16x256xf32> -> vector<16x256xf32>
    %c0_3 = arith.constant 0 : index
    %c0_4 = arith.constant 0 : index
    %3 = vector.load %arg3[%c0_3, %c0_4] : memref<1x256xf32, #tpu.memory_space<vmem>>, vector<1x256xf32>
    %4 = vector.broadcast %3 : vector<1x256xf32> to vector<16x256xf32>
    %5 = arith.addf %2, %4 : vector<16x256xf32>
    %cst_5 = arith.constant 5.000000e-01 : f32
    %6 = vector.broadcast %cst_5 : f32 to vector<16x256xf32>
    %7 = arith.mulf %6, %5 : vector<16x256xf32>
    %cst_6 = arith.constant 0.797884583 : f32
    %8 = vector.broadcast %cst_6 : f32 to vector<16x256xf32>
    %9 = arith.mulf %8, %5 : vector<16x256xf32>
    %cst_7 = arith.constant 4.471500e-02 : f32
    %10 = vector.broadcast %cst_7 : f32 to vector<16x256xf32>
    %11 = arith.mulf %10, %5 : vector<16x256xf32>
    %12 = arith.mulf %11, %5 : vector<16x256xf32>
    %cst_8 = arith.constant 1.000000e+00 : f32
    %13 = vector.broadcast %cst_8 : f32 to vector<16x256xf32>
    %14 = arith.addf %13, %12 : vector<16x256xf32>
    %15 = arith.mulf %9, %14 : vector<16x256xf32>
    %16 = math.tanh %15 : vector<16x256xf32>
    %cst_9 = arith.constant 1.000000e+00 : f32
    %17 = vector.broadcast %cst_9 : f32 to vector<16x256xf32>
    %18 = arith.addf %17, %16 : vector<16x256xf32>
    %19 = arith.mulf %7, %18 : vector<16x256xf32>
    %20 = arith.truncf %19 : vector<16x256xf32> to vector<16x256xbf16>
    %c0_10 = arith.constant 0 : index
    %c0_11 = arith.constant 0 : index
    %21 = vector.load %arg4[%c0_10, %c0_11] : memref<256x256xbf16, #tpu.memory_space<vmem>>, vector<256x256xbf16>
    %cst_12 = arith.constant dense<0.000000e+00> : vector<16x256xf32>
    %22 = tpu.matmul %20, %21, %cst_12 {dimension_numbers = #tpu.dot_dimension_numbers<[1], [0], [0], [1], [0, 0, 1, 1], [], []>} : vector<16x256xbf16>, vector<256x256xbf16>, vector<16x256xf32> -> vector<16x256xf32>
    %c0_13 = arith.constant 0 : index
    %c0_14 = arith.constant 0 : index
    %23 = vector.load %arg5[%c0_13, %c0_14] : memref<1x256xf32, #tpu.memory_space<vmem>>, vector<1x256xf32>
    %24 = vector.broadcast %23 : vector<1x256xf32> to vector<16x256xf32>
    %25 = arith.addf %22, %24 : vector<16x256xf32>
    %c0_15 = arith.constant 0 : index
    %c0_16 = arith.constant 0 : index
    %26 = vector.load %arg6[%c0_15, %c0_16] : memref<16x256xf32, #tpu.memory_space<vmem>>, vector<16x256xf32>
    tpu.vector_store %arg6[%c0_15, %c0_16], %25 {strides = array<i32>} : memref<16x256xf32, #tpu.memory_space<vmem>>, vector<16x256xf32>,
    return
  }
  func.func @transform_0(%arg0: i32) -> (i32, i32) {
    %c0_i32 = arith.constant 0 : i32
    %c0_i32_0 = arith.constant 0 : i32
    return %arg0, %c0_i32 : i32, i32
  }
  func.func @transform_1(%arg0: i32) -> (i32, i32) {
    %c0_i32 = arith.constant 0 : i32
    %c0_i32_0 = arith.constant 0 : i32
    %c0_i32_1 = arith.constant 0 : i32
    return %c0_i32, %c0_i32_0 : i32, i32
  }
  func.func @transform_2(%arg0: i32) -> (i32, i32) {
    %c0_i32 = arith.constant 0 : i32
    %c0_i32_0 = arith.constant 0 : i32
    %c0_i32_1 = arith.constant 0 : i32
    return %c0_i32, %c0_i32_0 : i32, i32
  }
  func.func @transform_3(%arg0: i32) -> (i32, i32) {
    %c0_i32 = arith.constant 0 : i32
    %c0_i32_0 = arith.constant 0 : i32
    %c0_i32_1 = arith.constant 0 : i32
    return %c0_i32, %c0_i32_0 : i32, i32
  }
  func.func @transform_4(%arg0: i32) -> (i32, i32) {
    %c0_i32 = arith.constant 0 : i32
    %c0_i32_0 = arith.constant 0 : i32
    %c0_i32_1 = arith.constant 0 : i32
    return %c0_i32, %c0_i32_0 : i32, i32
  }
  func.func @transform_5(%arg0: i32) -> (i32, i32) {
    %c0_i32 = arith.constant 0 : i32
    %c0_i32_0 = arith.constant 0 : i32
    return %arg0, %c0_i32 : i32, i32
  }
}

</mosaic_0001>

<llo_original>
// kernel: tpu_custom_call.1
$region0: #{tpu_custom_call.1}
  #allocation0 [shape = 'u32[]', space=smem, size = 0x4, offset = 0x4, fixed_abs, tag = 'smem constant byte address 0x4 - core index']
  #allocation1 [shape = 'u32[144,128]{1,0:T(1,128)}', space=vmem, size = 0x12000, scoped, tag = 'internal scratch']
  %s0 = inlined_call_operand.hbm [shape: bf16[16,256], index: 0, kind: input, shape index: {}]
  %s1 = inlined_call_operand.hbm [shape: bf16[256,256], index: 1, kind: input, shape index: {}]
  %s2 = inlined_call_operand.vmem [shape: f32[1,256], index: 2, kind: input, shape index: {}]
  %s3 = inlined_call_operand.hbm [shape: bf16[256,256], index: 3, kind: input, shape index: {}]
  %s4 = inlined_call_operand.vmem [shape: f32[1,256], index: 4, kind: input, shape index: {}]
  %s5 = inlined_call_operand.hbm [shape: f32[16,256], index: 5, kind: output, shape index: {}]
  %s6 = sld [smem:[#allocation0]]
  $region42: #{tpu_custom_call.1} parent=0
    _
  %s8 = ssub.s32 1, %s6
  %s9 = scalar_select 0, %s8, %s6
  $region1: #{tpu_custom_call.1} parent=0
    #allocation2 [shape = 'u8[8192]{0}', space=vmem, size = 0x2000, scoped, tag = 'input window, operand 0, single buffered']
    #allocation3 [shape = 's32[1]{0}', space=sflag, size = 0x4, scoped, tag = 'scoped memory for tpu_custom_call.1']
    #allocation4 [shape = 's32[1]{0}', space=sflag, size = 0x4, scoped, tag = 'scoped memory for tpu_custom_call.1']
    #allocation5 [shape = 'u8[131072]{0}', space=vmem, size = 0x20000, scoped, tag = 'input window, operand 1, single buffered']
    #allocation6 [shape = 's32[1]{0}', space=sflag, size = 0x4, scoped, tag = 'scoped memory for tpu_custom_call.1']
    #allocation7 [shape = 'u8[131072]{0}', space=vmem, size = 0x20000, scoped, tag = 'input window, operand 3, single buffered']
    #allocation8 [shape = 'u8[16384]{0}', space=vmem, size = 0x4000, scoped, tag = 'output window, operand 0, single buffered']
    %10 = vsyncpa [#allocation3], 0
    %11 = vsyncpa [#allocation6], 0
    %12 = vsyncpa [#allocation4], 0
    // Predicated region
    $region2: #{tpu_custom_call.1} parent=1 // pred_check
      _
    $region3: #{tpu_custom_call.1} parent=1 // pred_check_branch
      %14 = sbr.rel (0) target = $region5
    $region4: #{tpu_custom_call.1} parent=1 // pred_region
      %s16 = ssub.s32 256, 256
      %17 = vsyncadd [#allocation3], %s16
      %s18 = sshll.u32 [#allocation2], 4
      %s19 = int_to_ptr.vmem [resolvable:$true] %s18
      %24 = dma.hbm_to_vmem [thread:$0]  %s0, 256, %s19, [#allocation3], 128, 128, 8
    $region5: #{tpu_custom_call.1} parent=1 // pred_fallthru
      _
    // Predicated region
    $region6: #{tpu_custom_call.1} parent=1 // pred_check
      _
    $region7: #{tpu_custom_call.1} parent=1 // pred_check_branch
      %26 = sbr.rel (0) target = $region9
    $region8: #{tpu_custom_call.1} parent=1 // pred_region
      %s28 = ssub.s32 4096, 4096
      %29 = vsyncadd [#allocation6], %s28
      %s30 = sshll.u32 [#allocation5], 4
      %s31 = int_to_ptr.vmem [resolvable:$true] %s30
      %36 = dma.hbm_to_vmem [thread:$0]  %s1, 4096, %s31, [#allocation6], 128, 128, 8
    $region9: #{tpu_custom_call.1} parent=1 // pred_fallthru
      _
    // Predicated region
    $region10: #{tpu_custom_call.1} parent=1 // pred_check
      _
    $region11: #{tpu_custom_call.1} parent=1 // pred_check_branch
      %38 = sbr.rel (0) target = $region13
    $region12: #{tpu_custom_call.1} parent=1 // pred_region
      _
    $region13: #{tpu_custom_call.1} parent=1 // pred_fallthru
      _
    // Predicated region
    $region14: #{tpu_custom_call.1} parent=1 // pred_check
      _
    $region15: #{tpu_custom_call.1} parent=1 // pred_check_branch
      %40 = sbr.rel (0) target = $region17
    $region16: #{tpu_custom_call.1} parent=1 // pred_region
      %s42 = ssub.s32 4096, 4096
      %43 = vsyncadd [#allocation6], %s42
      %s44 = sshll.u32 [#allocation7], 4
      %s45 = int_to_ptr.vmem [resolvable:$true] %s44
      %50 = dma.hbm_to_vmem [thread:$0]  %s3, 4096, %s45, [#allocation6], 128, 128, 8
    $region17: #{tpu_custom_call.1} parent=1 // pred_fallthru
      _
    // Predicated region
    $region18: #{tpu_custom_call.1} parent=1 // pred_check
      _
    $region19: #{tpu_custom_call.1} parent=1 // pred_check_branch
      %52 = sbr.rel (0) target = $region21
    $region20: #{tpu_custom_call.1} parent=1 // pred_region
      _
    $region21: #{tpu_custom_call.1} parent=1 // pred_fallthru
      _
    // Predicated region
    $region22: #{tpu_custom_call.1} parent=1 // pred_check
      _
    $region23: #{tpu_custom_call.1} parent=1 // pred_check_branch
      %54 = sbr.rel (0) target = $region25
    $region24: #{tpu_custom_call.1} parent=1 // pred_region
      %55 = dma.done [#allocation3], 256
    $region25: #{tpu_custom_call.1} parent=1 // pred_fallthru
      _
    // Predicated region
    $region26: #{tpu_custom_call.1} parent=1 // pred_check
      _
    $region27: #{tpu_custom_call.1} parent=1 // pred_check_branch
      %57 = sbr.rel (0) target = $region29
    $region28: #{tpu_custom_call.1} parent=1 // pred_region
      %58 = dma.done [#allocation6], 4096
    $region29: #{tpu_custom_call.1} parent=1 // pred_fallthru
      _
    // Predicated region
    $region30: #{tpu_custom_call.1} parent=1 // pred_check
      _
    $region31: #{tpu_custom_call.1} parent=1 // pred_check_branch
      %60 = sbr.rel (0) target = $region33
    $region32: #{tpu_custom_call.1} parent=1 // pred_region
      %61 = dma.done [#allocation6], 4096
    $region33: #{tpu_custom_call.1} parent=1 // pred_fallthru
      _
    %v62 = vld [vmem:[#allocation2] sm:$0xff]
    %v63 = vld [vmem:[#allocation2 + $0x8] sm:$0xff]
    %v64 = vld [vmem:[#allocation5] sm:$0xff]
    %v65 = vld [vmem:[#allocation5 + $0x8] sm:$0xff]
    %v66 = vld [vmem:[#allocation5 + $0x10] sm:$0xff]
    %v67 = vld [vmem:[#allocation5 + $0x18] sm:$0xff]
    %v68 = vld [vmem:[#allocation5 + $0x20] sm:$0xff]
    %v69 = vld [vmem:[#allocation5 + $0x28] sm:$0xff]
    %v70 = vld [vmem:[#allocation5 + $0x30] sm:$0xff]
    %v71 = vld [vmem:[#allocation5 + $0x38] sm:$0xff]
    %v72 = vld [vmem:[#allocation5 + $0x40] sm:$0xff]
    %v73 = vld [vmem:[#allocation5 + $0x48] sm:$0xff]
    %v74 = vld [vmem:[#allocation5 + $0x50] sm:$0xff]
    %v75 = vld [vmem:[#allocation5 + $0x58] sm:$0xff]
    %v76 = vld [vmem:[#allocation5 + $0x60] sm:$0xff]
    %v77 = vld [vmem:[#allocation5 + $0x68] sm:$0xff]
    %v78 = vld [vmem:[#allocation5 + $0x70] sm:$0xff]
    %v79 = vld [vmem:[#allocation5 + $0x78] sm:$0xff]
    %v80 = vld [vmem:[#allocation5 + $0x80] sm:$0xff]
    %v81 = vld [vmem:[#allocation5 + $0x88] sm:$0xff]
    %v82 = vld [vmem:[#allocation5 + $0x90] sm:$0xff]
    %v83 = vld [vmem:[#allocation5 + $0x98] sm:$0xff]
    %v84 = vld [vmem:[#allocation5 + $0xa0] sm:$0xff]
    %v85 = vld [vmem:[#allocation5 + $0xa8] sm:$0xff]
    %v86 = vld [vmem:[#allocation5 + $0xb0] sm:$0xff]
    %v87 = vld [vmem:[#allocation5 + $0xb8] sm:$0xff]
    %v88 = vld [vmem:[#allocation5 + $0xc0] sm:$0xff]
    %v89 = vld [vmem:[#allocation5 + $0xc8] sm:$0xff]
    %v90 = vld [vmem:[#allocation5 + $0xd0] sm:$0xff]
    %v91 = vld [vmem:[#allocation5 + $0xd8] sm:$0xff]
    %v92 = vld [vmem:[#allocation5 + $0xe0] sm:$0xff]
    %v93 = vld [vmem:[#allocation5 + $0xe8] sm:$0xff]
    %v94 = vld [vmem:[#allocation5 + $0xf0] sm:$0xff]
    %v95 = vld [vmem:[#allocation5 + $0xf8] sm:$0xff]
    %v96 = vld [vmem:[%s2] sm:$0x3]
    %v98 = vlaneseq
    %v99 = vshrl.u32 %v98, 7
    %v100 = vsub.s32 0, %v99
    %v101 = vrot.slane %v96, %v100
    %v102 = vlaneseq
    %v103 = vshrl.u32 %v102, 7
    %v104 = vsub.s32 1, %v103
    %v105 = vrot.slane %v96, %v104
    %v110 = vunpack.c.l.b16 %v62
    %v111 = vunpack.c.h.b16 %v62
    %v112 = vunpack.c.l.b16 %v63
    %v113 = vunpack.c.h.b16 %v63
    %v114 = vpack.c.b16 %v112, %v110
    %v115 = vpack.c.b16 %v113, %v111
    %v150 = vunpack.c.l.b16 %v64
    %v151 = vunpack.c.h.b16 %v64
    %v152 = vunpack.c.l.b16 %v65
    %v153 = vunpack.c.h.b16 %v65
    %v154 = vunpack.c.l.b16 %v66
    %v155 = vunpack.c.h.b16 %v66
    %v156 = vunpack.c.l.b16 %v67
    %v157 = vunpack.c.h.b16 %v67
    %v158 = vunpack.c.l.b16 %v68
    %v159 = vunpack.c.h.b16 %v68
    %v160 = vunpack.c.l.b16 %v69
    %v161 = vunpack.c.h.b16 %v69
    %v162 = vunpack.c.l.b16 %v70
    %v163 = vunpack.c.h.b16 %v70
    %v164 = vunpack.c.l.b16 %v71
    %v165 = vunpack.c.h.b16 %v71
    %v166 = vunpack.c.l.b16 %v72
    %v167 = vunpack.c.h.b16 %v72
    %v168 = vunpack.c.l.b16 %v73
    %v169 = vunpack.c.h.b16 %v73
    %v170 = vunpack.c.l.b16 %v74
    %v171 = vunpack.c.h.b16 %v74
    %v172 = vunpack.c.l.b16 %v75
    %v173 = vunpack.c.h.b16 %v75
    %v174 = vunpack.c.l.b16 %v76
    %v175 = vunpack.c.h.b16 %v76
    %v176 = vunpack.c.l.b16 %v77
    %v177 = vunpack.c.h.b16 %v77
    %v178 = vunpack.c.l.b16 %v78
    %v179 = vunpack.c.h.b16 %v78
    %v180 = vunpack.c.l.b16 %v79
    %v181 = vunpack.c.h.b16 %v79
    %v182 = vunpack.c.l.b16 %v80
    %v183 = vunpack.c.h.b16 %v80
    %v184 = vunpack.c.l.b16 %v81
    %v185 = vunpack.c.h.b16 %v81
    %v186 = vunpack.c.l.b16 %v82
    %v187 = vunpack.c.h.b16 %v82
    %v188 = vunpack.c.l.b16 %v83
    %v189 = vunpack.c.h.b16 %v83
    %v190 = vunpack.c.l.b16 %v84
    %v191 = vunpack.c.h.b16 %v84
    %v192 = vunpack.c.l.b16 %v85
    %v193 = vunpack.c.h.b16 %v85
    %v194 = vunpack.c.l.b16 %v86
    %v195 = vunpack.c.h.b16 %v86
    %v196 = vunpack.c.l.b16 %v87
    %v197 = vunpack.c.h.b16 %v87
    %v198 = vunpack.c.l.b16 %v88
    %v199 = vunpack.c.h.b16 %v88
    %v200 = vunpack.c.l.b16 %v89
    %v201 = vunpack.c.h.b16 %v89
    %v202 = vunpack.c.l.b16 %v90
    %v203 = vunpack.c.h.b16 %v90
    %v204 = vunpack.c.l.b16 %v91
    %v205 = vunpack.c.h.b16 %v91
    %v206 = vunpack.c.l.b16 %v92
    %v207 = vunpack.c.h.b16 %v92
    %v208 = vunpack.c.l.b16 %v93
    %v209 = vunpack.c.h.b16 %v93
    %v210 = vunpack.c.l.b16 %v94
    %v211 = vunpack.c.h.b16 %v94
    %v212 = vunpack.c.l.b16 %v95
    %v213 = vunpack.c.h.b16 %v95
    %v214 = vpack.c.b16 %v152, %v150
    %v215 = vpack.c.b16 %v153, %v151
    %v216 = vpack.c.b16 %v156, %v154
    %v217 = vpack.c.b16 %v157, %v155
    %v218 = vpack.c.b16 %v160, %v158
    %v219 = vpack.c.b16 %v161, %v159
    %v220 = vpack.c.b16 %v164, %v162
    %v221 = vpack.c.b16 %v165, %v163
    %v222 = vpack.c.b16 %v168, %v166
    %v223 = vpack.c.b16 %v169, %v167
    %v224 = vpack.c.b16 %v172, %v170
    %v225 = vpack.c.b16 %v173, %v171
    %v226 = vpack.c.b16 %v176, %v174
    %v227 = vpack.c.b16 %v177, %v175
    %v228 = vpack.c.b16 %v180, %v178
    %v229 = vpack.c.b16 %v181, %v179
    %v230 = vpack.c.b16 %v184, %v182
    %v231 = vpack.c.b16 %v185, %v183
    %v232 = vpack.c.b16 %v188, %v186
    %v233 = vpack.c.b16 %v189, %v187
    %v234 = vpack.c.b16 %v192, %v190
    %v235 = vpack.c.b16 %v193, %v191
    %v236 = vpack.c.b16 %v196, %v194
    %v237 = vpack.c.b16 %v197, %v195
    %v238 = vpack.c.b16 %v200, %v198
    %v239 = vpack.c.b16 %v201, %v199
    %v240 = vpack.c.b16 %v204, %v202
    %v241 = vpack.c.b16 %v205, %v203
    %v242 = vpack.c.b16 %v208, %v206
    %v243 = vpack.c.b16 %v209, %v207
    %v244 = vpack.c.b16 %v212, %v210
    %v245 = vpack.c.b16 %v213, %v211
    %278 = vmatprep.subr.bf16.mxu0 %v215
    %279 = vmatpush1.bf16.msra.mxu0 %v214
    %280 = vmatprep.subr.bf16.mxu0 %v217
    %281 = vmatpush1.bf16.msra.mxu0 %v216
    %282 = vmatprep.subr.bf16.mxu0 %v219
    %283 = vmatpush1.bf16.msra.mxu0 %v218
    %284 = vmatprep.subr.bf16.mxu0 %v221
    %285 = vmatpush1.bf16.msra.mxu0 %v220
    %286 = vmatprep.subr.bf16.mxu0 %v223
    %287 = vmatpush1.bf16.msra.mxu0 %v222
    %288 = vmatprep.subr.bf16.mxu0 %v225
    %289 = vmatpush1.bf16.msra.mxu0 %v224
    %290 = vmatprep.subr.bf16.mxu0 %v227
    %291 = vmatpush1.bf16.msra.mxu0 %v226
    %292 = vmatprep.subr.bf16.mxu0 %v229
    %293 = vmatpush1.bf16.msra.mxu0 %v228
    %294 = vmatprep.subr.bf16.mxu0 %v231
    %295 = vmatpush1.bf16.msra.mxu0 %v230
    %296 = vmatprep.subr.bf16.mxu0 %v233
    %297 = vmatpush1.bf16.msra.mxu0 %v232
    %298 = vmatprep.subr.bf16.mxu0 %v235
    %299 = vmatpush1.bf16.msra.mxu0 %v234
    %300 = vmatprep.subr.bf16.mxu0 %v237
    %301 = vmatpush1.bf16.msra.mxu0 %v236
    %302 = vmatprep.subr.bf16.mxu0 %v239
    %303 = vmatpush1.bf16.msra.mxu0 %v238
    %304 = vmatprep.subr.bf16.mxu0 %v241
    %305 = vmatpush1.bf16.msra.mxu0 %v240
    %306 = vmatprep.subr.bf16.mxu0 %v243
    %307 = vmatpush1.bf16.msra.mxu0 %v242
    %308 = vmatprep.subr.bf16.mxu0 %v245
    %309 = vmatpush1.bf16.msra.mxu0 %v244
    %310 = vmatprep.mubr.bf16.mxu0 %v115
    %311 = vmatmul.mubr.bf16.gmra.mrb[0].mxu0 %v114
    %v312 = vpop.f32.mrb[0].mxu0
    %v313 = vadd.f32 %v101, %v312
    %v314 = vpop.f32.mrb[0].mxu0
    %v315 = vadd.f32 %v105, %v314
    %v316 = vpop.f32.mrb[0].mxu0
    %v317 = vadd.f32 %v101, %v316
    %v318 = vpop.f32.mrb[0].mxu0
    %v319 = vadd.f32 %v105, %v318
    %320 = vdwg.mxu0
    %v321 = vmul.f32 %v313, 0.5
    %v322 = vmul.f32 %v315, 0.5
    %v323 = vmul.f32 %v317, 0.5
    %v324 = vmul.f32 %v319, 0.5
    %v325 = vmul.f32 %v313, 0.7978846
    %v326 = vmul.f32 %v315, 0.7978846
    %v327 = vmul.f32 %v317, 0.7978846
    %v328 = vmul.f32 %v319, 0.7978846
    %v329 = vmul.f32 %v313, 0.044715
    %v330 = vmul.f32 %v315, 0.044715
    %v331 = vmul.f32 %v317, 0.044715
    %v332 = vmul.f32 %v319, 0.044715
    %v333 = vmul.f32 %v329, %v313
    %v334 = vmul.f32 %v330, %v315
    %v335 = vmul.f32 %v331, %v317
    %v336 = vmul.f32 %v332, %v319
    %v337 = vadd.f32 %v333, 1.0
    %v338 = vadd.f32 %v334, 1.0
    %v339 = vadd.f32 %v335, 1.0
    %v340 = vadd.f32 %v336, 1.0
    %v341 = vmul.f32 %v325, %v337
    %v342 = vmul.f32 %v326, %v338
    %v343 = vmul.f32 %v327, %v339
    %v344 = vmul.f32 %v328, %v340
    %v345 = vtanh.pop %v341
    %v346 = vtanh.pop %v342
    %v347 = vtanh.pop %v343
    %v348 = vtanh.pop %v344
    %v349 = vadd.f32 %v345, 1.0
    %v350 = vadd.f32 %v346, 1.0
    %v351 = vadd.f32 %v347, 1.0
    %v352 = vadd.f32 %v348, 1.0
    %v353 = vmul.f32 %v321, %v349
    %v354 = vmul.f32 %v322, %v350
    %v355 = vmul.f32 %v323, %v351
    %v356 = vmul.f32 %v324, %v352
    %v357 = vpack.c.bf16 %v355, %v353
    %v358 = vpack.c.bf16 %v356, %v354
    %v359 = vld [vmem:[#allocation7] sm:$0xff]
    %v360 = vld [vmem:[#allocation7 + $0x8] sm:$0xff]
    %v361 = vld [vmem:[#allocation7 + $0x10] sm:$0xff]
    %v362 = vld [vmem:[#allocation7 + $0x18] sm:$0xff]
    %v363 = vld [vmem:[#allocation7 + $0x20] sm:$0xff]
    %v364 = vld [vmem:[#allocation7 + $0x28] sm:$0xff]
    %v365 = vld [vmem:[#allocation7 + $0x30] sm:$0xff]
    %v366 = vld [vmem:[#allocation7 + $0x38] sm:$0xff]
    %v367 = vld [vmem:[#allocation7 + $0x40] sm:$0xff]
    %v368 = vld [vmem:[#allocation7 + $0x48] sm:$0xff]
    %v369 = vld [vmem:[#allocation7 + $0x50] sm:$0xff]
    %v370 = vld [vmem:[#allocation7 + $0x58] sm:$0xff]
    %v371 = vld [vmem:[#allocation7 + $0x60] sm:$0xff]
    %v372 = vld [vmem:[#allocation7 + $0x68] sm:$0xff]
    %v373 = vld [vmem:[#allocation7 + $0x70] sm:$0xff]
    %v374 = vld [vmem:[#allocation7 + $0x78] sm:$0xff]
    %v375 = vld [vmem:[#allocation7 + $0x80] sm:$0xff]
    %v376 = vld [vmem:[#allocation7 + $0x88] sm:$0xff]
    %v377 = vld [vmem:[#allocation7 + $0x90] sm:$0xff]
    %v378 = vld [vmem:[#allocation7 + $0x98] sm:$0xff]
    %v379 = vld [vmem:[#allocation7 + $0xa0] sm:$0xff]
    %v380 = vld [vmem:[#allocation7 + $0xa8] sm:$0xff]
    %v381 = vld [vmem:[#allocation7 + $0xb0] sm:$0xff]
    %v382 = vld [vmem:[#allocation7 + $0xb8] sm:$0xff]
    %v383 = vld [vmem:[#allocation7 + $0xc0] sm:$0xff]
    %v384 = vld [vmem:[#allocation7 + $0xc8] sm:$0xff]
    %v385 = vld [vmem:[#allocation7 + $0xd0] sm:$0xff]
    %v386 = vld [vmem:[#allocation7 + $0xd8] sm:$0xff]
    %v387 = vld [vmem:[#allocation7 + $0xe0] sm:$0xff]
    %v388 = vld [vmem:[#allocation7 + $0xe8] sm:$0xff]
    %v389 = vld [vmem:[#allocation7 + $0xf0] sm:$0xff]
    %v390 = vld [vmem:[#allocation7 + $0xf8] sm:$0xff]
    %v391 = vld [vmem:[%s4] sm:$0x3]
    %v393 = vlaneseq
    %v394 = vshrl.u32 %v393, 7
    %v395 = vsub.s32 0, %v394
    %v396 = vrot.slane %v391, %v395
    %v397 = vlaneseq
    %v398 = vshrl.u32 %v397, 7
    %v399 = vsub.s32 1, %v398
    %v400 = vrot.slane %v391, %v399
    %v435 = vunpack.c.l.b16 %v359
    %v436 = vunpack.c.h.b16 %v359
    %v437 = vunpack.c.l.b16 %v360
    %v438 = vunpack.c.h.b16 %v360
    %v439 = vunpack.c.l.b16 %v361
    %v440 = vunpack.c.h.b16 %v361
    %v441 = vunpack.c.l.b16 %v362
    %v442 = vunpack.c.h.b16 %v362
    %v443 = vunpack.c.l.b16 %v363
    %v444 = vunpack.c.h.b16 %v363
    %v445 = vunpack.c.l.b16 %v364
    %v446 = vunpack.c.h.b16 %v364
    %v447 = vunpack.c.l.b16 %v365
    %v448 = vunpack.c.h.b16 %v365
    %v449 = vunpack.c.l.b16 %v366
    %v450 = vunpack.c.h.b16 %v366
    %v451 = vunpack.c.l.b16 %v367
    %v452 = vunpack.c.h.b16 %v367
    %v453 = vunpack.c.l.b16 %v368
    %v454 = vunpack.c.h.b16 %v368
    %v455 = vunpack.c.l.b16 %v369
    %v456 = vunpack.c.h.b16 %v369
    %v457 = vunpack.c.l.b16 %v370
    %v458 = vunpack.c.h.b16 %v370
    %v459 = vunpack.c.l.b16 %v371
    %v460 = vunpack.c.h.b16 %v371
    %v461 = vunpack.c.l.b16 %v372
    %v462 = vunpack.c.h.b16 %v372
    %v463 = vunpack.c.l.b16 %v373
    %v464 = vunpack.c.h.b16 %v373
    %v465 = vunpack.c.l.b16 %v374
    %v466 = vunpack.c.h.b16 %v374
    %v467 = vunpack.c.l.b16 %v375
    %v468 = vunpack.c.h.b16 %v375
    %v469 = vunpack.c.l.b16 %v376
    %v470 = vunpack.c.h.b16 %v376
    %v471 = vunpack.c.l.b16 %v377
    %v472 = vunpack.c.h.b16 %v377
    %v473 = vunpack.c.l.b16 %v378
    %v474 = vunpack.c.h.b16 %v378
    %v475 = vunpack.c.l.b16 %v379
    %v476 = vunpack.c.h.b16 %v379
    %v477 = vunpack.c.l.b16 %v380
    %v478 = vunpack.c.h.b16 %v380
    %v479 = vunpack.c.l.b16 %v381
    %v480 = vunpack.c.h.b16 %v381
    %v481 = vunpack.c.l.b16 %v382
    %v482 = vunpack.c.h.b16 %v382
    %v483 = vunpack.c.l.b16 %v383
    %v484 = vunpack.c.h.b16 %v383
    %v485 = vunpack.c.l.b16 %v384
    %v486 = vunpack.c.h.b16 %v384
    %v487 = vunpack.c.l.b16 %v385
    %v488 = vunpack.c.h.b16 %v385
    %v489 = vunpack.c.l.b16 %v386
    %v490 = vunpack.c.h.b16 %v386
    %v491 = vunpack.c.l.b16 %v387
    %v492 = vunpack.c.h.b16 %v387
    %v493 = vunpack.c.l.b16 %v388
    %v494 = vunpack.c.h.b16 %v388
    %v495 = vunpack.c.l.b16 %v389
    %v496 = vunpack.c.h.b16 %v389
    %v497 = vunpack.c.l.b16 %v390
    %v498 = vunpack.c.h.b16 %v390
    %v499 = vpack.c.b16 %v437, %v435
    %v500 = vpack.c.b16 %v438, %v436
    %v501 = vpack.c.b16 %v441, %v439
    %v502 = vpack.c.b16 %v442, %v440
    %v503 = vpack.c.b16 %v445, %v443
    %v504 = vpack.c.b16 %v446, %v444
    %v505 = vpack.c.b16 %v449, %v447
    %v506 = vpack.c.b16 %v450, %v448
    %v507 = vpack.c.b16 %v453, %v451
    %v508 = vpack.c.b16 %v454, %v452
    %v509 = vpack.c.b16 %v457, %v455
    %v510 = vpack.c.b16 %v458, %v456
    %v511 = vpack.c.b16 %v461, %v459
    %v512 = vpack.c.b16 %v462, %v460
    %v513 = vpack.c.b16 %v465, %v463
    %v514 = vpack.c.b16 %v466, %v464
    %v515 = vpack.c.b16 %v469, %v467
    %v516 = vpack.c.b16 %v470, %v468
    %v517 = vpack.c.b16 %v473, %v471
    %v518 = vpack.c.b16 %v474, %v472
    %v519 = vpack.c.b16 %v477, %v475
    %v520 = vpack.c.b16 %v478, %v476
    %v521 = vpack.c.b16 %v481, %v479
    %v522 = vpack.c.b16 %v482, %v480
    %v523 = vpack.c.b16 %v485, %v483
    %v524 = vpack.c.b16 %v486, %v484
    %v525 = vpack.c.b16 %v489, %v487
    %v526 = vpack.c.b16 %v490, %v488
    %v527 = vpack.c.b16 %v493, %v491
    %v528 = vpack.c.b16 %v494, %v492
    %v529 = vpack.c.b16 %v497, %v495
    %v530 = vpack.c.b16 %v498, %v496
    %563 = vmatprep.subr.bf16.mxu0 %v500
    %564 = vmatpush1.bf16.msra.mxu0 %v499
    %565 = vmatprep.subr.bf16.mxu0 %v502
    %566 = vmatpush1.bf16.msra.mxu0 %v501
    %567 = vmatprep.subr.bf16.mxu0 %v504
    %568 = vmatpush1.bf16.msra.mxu0 %v503
    %569 = vmatprep.subr.bf16.mxu0 %v506
    %570 = vmatpush1.bf16.msra.mxu0 %v505
    %571 = vmatprep.subr.bf16.mxu0 %v508
    %572 = vmatpush1.bf16.msra.mxu0 %v507
    %573 = vmatprep.subr.bf16.mxu0 %v510
    %574 = vmatpush1.bf16.msra.mxu0 %v509
    %575 = vmatprep.subr.bf16.mxu0 %v512
    %576 = vmatpush1.bf16.msra.mxu0 %v511
    %577 = vmatprep.subr.bf16.mxu0 %v514
    %578 = vmatpush1.bf16.msra.mxu0 %v513
    %579 = vmatprep.subr.bf16.mxu0 %v516
    %580 = vmatpush1.bf16.msra.mxu0 %v515
    %581 = vmatprep.subr.bf16.mxu0 %v518
    %582 = vmatpush1.bf16.msra.mxu0 %v517
    %583 = vmatprep.subr.bf16.mxu0 %v520
    %584 = vmatpush1.bf16.msra.mxu0 %v519
    %585 = vmatprep.subr.bf16.mxu0 %v522
    %586 = vmatpush1.bf16.msra.mxu0 %v521
    %587 = vmatprep.subr.bf16.mxu0 %v524
    %588 = vmatpush1.bf16.msra.mxu0 %v523
    %589 = vmatprep.subr.bf16.mxu0 %v526
    %590 = vmatpush1.bf16.msra.mxu0 %v525
    %591 = vmatprep.subr.bf16.mxu0 %v528
    %592 = vmatpush1.bf16.msra.mxu0 %v527
    %593 = vmatprep.subr.bf16.mxu0 %v530
    %594 = vmatpush1.bf16.msra.mxu0 %v529
    %595 = vmatprep.mubr.bf16.mxu0 %v358
    %596 = vmatmul.mubr.bf16.gmra.mrb[0].mxu0 %v357
    %v597 = vpop.f32.mrb[0].mxu0
    %v598 = vadd.f32 %v396, %v597
    %v599 = vpop.f32.mrb[0].mxu0
    %v600 = vadd.f32 %v400, %v599
    %v601 = vpop.f32.mrb[0].mxu0
    %v602 = vadd.f32 %v396, %v601
    %v603 = vpop.f32.mrb[0].mxu0
    %v604 = vadd.f32 %v400, %v603
    %605 = vdwg.mxu0
    %606 = vst [vmem:[#allocation8] sm:$0xff] %v598
    %607 = vst [vmem:[#allocation8 + $0x8] sm:$0xff] %v600
    %608 = vst [vmem:[#allocation8 + $0x10] sm:$0xff] %v602
    %609 = vst [vmem:[#allocation8 + $0x18] sm:$0xff] %v604
    // Predicated region
    $region34: #{tpu_custom_call.1} parent=1 // pred_check
      _
    $region35: #{tpu_custom_call.1} parent=1 // pred_check_branch
      %611 = sbr.rel (0) target = $region37
    $region36: #{tpu_custom_call.1} parent=1 // pred_region
      %s613 = ssub.s32 512, 512
      %614 = vsyncadd [#allocation4], %s613
      %s615 = sshll.u32 [#allocation8], 4
      %s616 = int_to_ptr.vmem [resolvable:$true] %s615
      %621 = dma.vmem_to_hbm [thread:$0]  %s616, 512, %s5, [#allocation4], 256, 256, 16
    $region37: #{tpu_custom_call.1} parent=1 // pred_fallthru
      _
    // Predicated region
    $region38: #{tpu_custom_call.1} parent=1 // pred_check
      _
    $region39: #{tpu_custom_call.1} parent=1 // pred_check_branch
      %623 = sbr.rel (0) target = $region41
    $region40: #{tpu_custom_call.1} parent=1 // pred_region
      %624 = dma.done [#allocation4], 512
    $region41: #{tpu_custom_call.1} parent=1 // pred_fallthru
      _
    %625 = vsyncpa [#allocation3], 1
    %626 = vsyncpa [#allocation6], 1
    %627 = vsyncpa [#allocation4], 1

</llo_original>
